<compile_context>
chip_gen: v6e
topology: v6e:2x2x1
jax: 0.10.0
libtpu: 0.0.40
codegen_flags: <defaults>
</compile_context>

<pallas_src>
import functools

import jax
import jax.numpy as jnp
from jax.experimental import pallas as pl
from jax.experimental.pallas import tpu as pltpu


def _round_up(x, m):
    return ((x + m - 1) // m) * m


def _patch_embed_kernel(x_ref, w_ref, b_ref, o_ref):
    # x_ref: (tm, Kp) bf16 patch rows; w_ref: (Kp, Ep) bf16; b_ref: (1, Ep) f32
    # o_ref: (tm, Ep) f32.  Accumulate in f32 on the MXU, add bias, store.
    acc = jnp.dot(x_ref[...], w_ref[...], preferred_element_type=jnp.float32)
    o_ref[...] = (acc + b_ref[...]).astype(o_ref.dtype)


def prepare_patch_embed_params(weight, bias, *, compute_dtype=jnp.bfloat16):
    """Once-per-model parameter prep (hoisted out of the forward hot path).

    Args:
      weight: [E, C, P, P]  PyTorch Conv2d weight layout.
      bias:   [E]
    Returns:
      w2d: [Kp, Ep] compute_dtype, zero-padded to 128-multiples (K = C*P*P).
      b2d: [1, Ep]  float32, zero-padded.
    """
    E, C, P, _ = weight.shape
    K = C * P * P
    Kp = _round_up(K, 128)
    Ep = _round_up(E, 128)
    w2d = weight.reshape(E, K).T.astype(compute_dtype)          # (c, ph, pw) order
    w2d = jnp.pad(w2d, ((0, Kp - K), (0, Ep - E)))
    b2d = jnp.pad(bias.astype(jnp.float32).reshape(1, E), ((0, 0), (0, Ep - E)))
    return w2d, b2d


def patch_embed(x, w2d, b2d, *, patch_size, embed_dim, block_m=512,
                vmem_limit_bytes=32 * 1024 * 1024):
    """Forward pass of PatchEmbed.

    Args:
      x:    [B, C, H, W]   (NCHW, like PyTorch)
      w2d:  [Kp, Ep]       prepared via prepare_patch_embed_params()
      b2d:  [1, Ep]        prepared via prepare_patch_embed_params()
    Returns:
      [B, num_patches, embed_dim]  float32
    """
    B, C, H, W = x.shape
    P = patch_size
    assert H % P == 0 and W % P == 0
    gh, gw = H // P, W // P
    num_patches = gh * gw
    M = B * num_patches
    K = C * P * P
    Kp, Ep = w2d.shape
    E = embed_dim
    compute_dtype = w2d.dtype
    in_bytes = jnp.dtype(compute_dtype).itemsize

    # Patchify: [B,C,gh,P,gw,P] -> [B,gh,gw,C,P,P] -> [M, K], cast to bf16.
    patches = x.reshape(B, C, gh, P, gw, P).transpose(0, 2, 4, 1, 3, 5)
    patches = patches.reshape(M, K).astype(compute_dtype)

    # Pick the largest tm (multiple of 8, starting from block_m) whose
    # double-buffered tiles + resident weight fit ~half the scoped VMEM limit.
    def _fits(t):
        need = (2 * t * Kp * in_bytes      # x tile, double-buffered
                + 2 * t * Ep * 4           # f32 output tile, double-buffered
                + 2 * Kp * Ep * in_bytes   # weight (constant index_map; 2 bufs)
                + 2 * Ep * 4)              # bias
        return need <= vmem_limit_bytes // 2

    tm = block_m
    while tm > 8 and not _fits(tm):
        tm //= 2
    tm = max(8, (tm // 8) * 8)             # sublane alignment
    tm = min(tm, _round_up(M, 8))          # don't exceed the (padded) problem

    Mp = _round_up(M, tm)
    grid_m = Mp // tm

    # Pad M remainder rows and K lanes with zeros (zeros don't affect the dot).
    patches = jnp.pad(patches, ((0, Mp - M), (0, Kp - K)))

    out = pl.pallas_call(
        _patch_embed_kernel,
        out_shape=jax.ShapeDtypeStruct((Mp, Ep), jnp.float32),
        grid_spec=pltpu.PrefetchScalarGridSpec(
            num_scalar_prefetch=0,
            grid=(grid_m,),
            in_specs=[
                pl.BlockSpec((tm, Kp), lambda i: (i, 0)),   # patch rows (tiled)
                pl.BlockSpec((Kp, Ep), lambda i: (0, 0)),   # weight (resident)
                pl.BlockSpec((1, Ep), lambda i: (0, 0)),    # bias (resident)
            ],
            out_specs=pl.BlockSpec((tm, Ep), lambda i: (i, 0)),
        ),
        compiler_params=pltpu.CompilerParams(
            # Independent row tiles -> megacore sharding on v7x (2 TCs).
            dimension_semantics=("parallel",),
            vmem_limit_bytes=vmem_limit_bytes,
            # Let XLA fuse the patchify reshape/transpose/pad into the
            # kernel's input DMA instead of materializing it in HBM.
            allow_input_fusion=[True, False, False],
        ),
    )(patches, w2d, b2d)

    # Strip M / E padding and restore [B, num_patches, E].
    return out[:M, :E].reshape(B, num_patches, E)


def reference_patch_embed(x, weight, bias, *, patch_size,
                          compute_dtype=jnp.float32):
    """Pure-JAX reference (conv_general_dilated), matching PyTorch semantics."""
    out = jax.lax.conv_general_dilated(
        x.astype(compute_dtype), weight.astype(compute_dtype),
        window_strides=(patch_size, patch_size),
        padding="VALID",
        dimension_numbers=("NCHW", "OIHW", "NCHW"),
        preferred_element_type=jnp.float32,
    ) + bias.reshape(1, -1, 1, 1).astype(jnp.float32)
    B, E, gh, gw = out.shape
    return out.reshape(B, E, gh * gw).transpose(0, 2, 1)


if __name__ == "__main__":
    # Small shapes consistent with the module.
    B, C, IMG, P, EMBED = 2, 4, 16, 4, 32

    key = jax.random.PRNGKey(0)
    kx, kw, kb = jax.random.split(key, 3)

    x = jax.random.normal(kx, (B, C, IMG, IMG), dtype=jnp.float32)
    # Deterministic parameter init (synthetic, not a checkpoint load).
    fan_in = C * P * P
    bound = 1.0 / (fan_in ** 0.5)
    weight = jax.random.uniform(kw, (EMBED, C, P, P), jnp.float32, -bound, bound)
    bias = jax.random.uniform(kb, (EMBED,), jnp.float32, -bound, bound)

    # Hoisted, once-per-model parameter preprocessing (bf16 [K,E], padded).
    w2d, b2d = prepare_patch_embed_params(weight, bias, compute_dtype=jnp.bfloat16)

    fwd = jax.jit(functools.partial(patch_embed, patch_size=P, embed_dim=EMBED))
    out = jax.block_until_ready(fwd(x, w2d, b2d))
    assert out.shape == (B, (IMG // P) ** 2, EMBED), out.shape

    # Tight check: reference fed the same bf16-cast inputs, f32 accumulation.
    ref_bf16 = reference_patch_embed(x, weight, bias, patch_size=P,
                                     compute_dtype=jnp.bfloat16)
    assert jnp.allclose(out, ref_bf16, atol=2e-3, rtol=2e-3), "mismatch vs bf16 reference"

    # Loose sanity check against the full-f32 reference (bf16 input rounding).
    ref_f32 = reference_patch_embed(x, weight, bias, patch_size=P,
                                    compute_dtype=jnp.float32)
    assert jnp.allclose(out, ref_f32, atol=5e-2, rtol=5e-2), "mismatch vs f32 reference"

    print("KERNEL_OK")
</pallas_src>

<mosaic_0001>
module attributes {stable_mosaic.version = 11 : i64} {
  func.func @_patch_embed_kernel(%arg0: i32, %arg1: memref<32x128xbf16, #tpu.memory_space<vmem>>, %arg2: memref<128x128xbf16, #tpu.memory_space<vmem>>, %arg3: memref<1x128xf32, #tpu.memory_space<vmem>>, %arg4: memref<32x128xf32, #tpu.memory_space<vmem>>) attributes {dimension_semantics = [#tpu.dimension_semantics<parallel>], iteration_bounds = array<i64: 1>, scalar_prefetch = 0 : i64, scratch_operands = 0 : i64, tpu.core_type = #tpu.core_type<tc>, window_params = [{transform_indices = @transform_0, window_bounds = array<i64: 32, 128>}, {pipeline_mode = #tpu.pipeline_mode<synchronous>, transform_indices = @transform_1, window_bounds = array<i64: 128, 128>}, {pipeline_mode = #tpu.pipeline_mode<synchronous>, transform_indices = @transform_2, window_bounds = array<i64: 1, 128>}, {transform_indices = @transform_3, window_bounds = array<i64: 32, 128>}]} {
    %c0 = arith.constant 0 : index
    %c0_0 = arith.constant 0 : index
    %0 = vector.load %arg1[%c0, %c0_0] : memref<32x128xbf16, #tpu.memory_space<vmem>>, vector<32x128xbf16>
    %c0_1 = arith.constant 0 : index
    %c0_2 = arith.constant 0 : index
    %1 = vector.load %arg2[%c0_1, %c0_2] : memref<128x128xbf16, #tpu.memory_space<vmem>>, vector<128x128xbf16>
    %cst = arith.constant dense<0.000000e+00> : vector<32x128xf32>
    %2 = tpu.matmul %0, %1, %cst {dimension_numbers = #tpu.dot_dimension_numbers<[1], [0], [0], [1], [0, 0, 1, 1], [], []>} : vector<32x128xbf16>, vector<128x128xbf16>, vector<32x128xf32> -> vector<32x128xf32>
    %c0_3 = arith.constant 0 : index
    %c0_4 = arith.constant 0 : index
    %3 = vector.load %arg3[%c0_3, %c0_4] : memref<1x128xf32, #tpu.memory_space<vmem>>, vector<1x128xf32>
    %4 = vector.broadcast %3 : vector<1x128xf32> to vector<32x128xf32>
    %5 = arith.addf %2, %4 : vector<32x128xf32>
    %c0_5 = arith.constant 0 : index
    %c0_6 = arith.constant 0 : index
    %6 = vector.load %arg4[%c0_5, %c0_6] : memref<32x128xf32, #tpu.memory_space<vmem>>, vector<32x128xf32>
    tpu.vector_store %arg4[%c0_5, %c0_6], %5 {strides = array<i32>} : memref<32x128xf32, #tpu.memory_space<vmem>>, vector<32x128xf32>,
    return
  }
  func.func @transform_0(%arg0: i32) -> (i32, i32) {
    %c0_i32 = arith.constant 0 : i32
    %c0_i32_0 = arith.constant 0 : i32
    return %arg0, %c0_i32 : i32, i32
  }
  func.func @transform_1(%arg0: i32) -> (i32, i32) {
    %c0_i32 = arith.constant 0 : i32
    %c0_i32_0 = arith.constant 0 : i32
    %c0_i32_1 = arith.constant 0 : i32
    return %c0_i32, %c0_i32_0 : i32, i32
  }
  func.func @transform_2(%arg0: i32) -> (i32, i32) {
    %c0_i32 = arith.constant 0 : i32
    %c0_i32_0 = arith.constant 0 : i32
    %c0_i32_1 = arith.constant 0 : i32
    return %c0_i32, %c0_i32_0 : i32, i32
  }
  func.func @transform_3(%arg0: i32) -> (i32, i32) {
    %c0_i32 = arith.constant 0 : i32
    %c0_i32_0 = arith.constant 0 : i32
    return %arg0, %c0_i32 : i32, i32
  }
}

</mosaic_0001>

<llo_original>
// kernel: patch_embed.2
$region0: #{patch_embed.2}
  #allocation0 [shape = 'u32[]', space=smem, size = 0x4, offset = 0x4, fixed_abs, tag = 'smem constant byte address 0x4 - core index']
  #allocation1 [shape = 'u32[144,128]{1,0:T(1,128)}', space=vmem, size = 0x12000, scoped, tag = 'internal scratch']
  #allocation2 [shape = 'u32[2048]{0}', space=vmem, size = 0x2000, scoped, tag = 'scoped memory for patch_embed.2']
  #allocation3 [shape = 'u32[2048]{0}', space=vmem, size = 0x2000, scoped, tag = 'scoped memory for patch_embed.2']
  #allocation4 [shape = 'u32[2048]{0}', space=vmem, size = 0x2000, scoped, tag = 'scoped memory for patch_embed.2']
  #allocation5 [shape = 'u32[2048]{0}', space=vmem, size = 0x2000, scoped, tag = 'scoped memory for patch_embed.2']
  #allocation6 [shape = 'u32[2048]{0}', space=vmem, size = 0x2000, scoped, tag = 'scoped memory for patch_embed.2']
  %s0 = inlined_call_operand.vmem [shape: bf16[128,128], index: 0, kind: input, shape index: {}]
  %s1 = inlined_call_operand.vmem [shape: f32[1,128], index: 1, kind: input, shape index: {}]
  %s2 = inlined_call_operand.vmem [shape: bf16[32,64], index: 2, kind: input, shape index: {}]
  %s3 = inlined_call_operand.<no memory space> [shape: bf16[], index: 3, kind: input, shape index: {}]
  %s4 = inlined_call_operand.hbm [shape: f32[32,128], index: 4, kind: output, shape index: {}]
  %s5 = sld [smem:[#allocation0]]
  $region22: #{patch_embed.2} parent=0
    _
  %s7 = ssub.s32 1, %s5
  %s8 = scalar_select 0, %s7, %s5
  %v9 = vstv %s3
  %v10 = vunpack.i.l.bf16 %v9
  %v12 = vunpack.i.h.bf16 %v9
  $region1: #{patch_embed.2} parent=0
    #allocation7 [shape = 'u8[16384]{0}', space=vmem, size = 0x4000, scoped, tag = 'output window, operand 0, single buffered']
    #allocation8 [shape = 's32[1]{0}', space=sflag, size = 0x4, scoped, tag = 'scoped memory for patch_embed.2']
    #allocation9 [shape = 'u8[8192]{0}', space=vmem, size = 0x2000, dematerialized = true, scoped, tag = 'FusionAdapter Buffer %fusion.1 = bf16[32,128]{1,0:T(8,128)(2,1)} fusion(%param_2.1, %param_3), kind=kLoop, calls=%fused_computation.2.clone, metadata={op_name="jit(patch_embed)/jit(_pad)/pad" stack_frame_id=9}']
    %14 = vsyncpa [#allocation8], 0
    // Predicated region
    $region2: #{patch_embed.2} parent=1 // pred_check
      _
    $region3: #{patch_embed.2} parent=1 // pred_check_branch
      %16 = sbr.rel (0) target = $region5
    $region4: #{patch_embed.2} parent=1 // pred_region
      _
    $region5: #{patch_embed.2} parent=1 // pred_fallthru
      _
    // Predicated region
    $region6: #{patch_embed.2} parent=1 // pred_check
      _
    $region7: #{patch_embed.2} parent=1 // pred_check_branch
      %18 = sbr.rel (0) target = $region9
    $region8: #{patch_embed.2} parent=1 // pred_region
      _
    $region9: #{patch_embed.2} parent=1 // pred_fallthru
      _
    // Predicated region
    $region10: #{patch_embed.2} parent=1 // pred_check
      _
    $region11: #{patch_embed.2} parent=1 // pred_check_branch
      %20 = sbr.rel (0) target = $region13
    $region12: #{patch_embed.2} parent=1 // pred_region
      _
    $region13: #{patch_embed.2} parent=1 // pred_fallthru
      _
    %s22 = sor.u32 255, 127
    %s23 = sand.u32 %s22, 85
    %s24 = sshrl.u32 %s23, 1
    %s25 = sor.u32 %s23, %s24
    %s26 = sand.u32 51, %s25
    %s27 = sshrl.u32 %s26, 2
    %s28 = sor.u32 %s26, %s27
    %s29 = sand.u32 15, %s28
    %v30 = vld [vmem:[%s2] sm:%s29]
    %v31 = vunpack.c.l.bf16 %v30
    %v32 = vunpack.c.h.bf16 %v30
    %v33 = vlaneseq
    %v34 = vand.u32 %v33, 127
    %vm36 = vcmp.lt.s32.totalorder %v34, 64
    %v37 = vsel %vm36, %v31, %v10
    %v38 = vpack.c.bf16 0.0, %v37
    %s40 = ssub.s32 16, 1
    %41 = vst [vmem:[#allocation9] sm:%s40] %v38
    %s42 = scalar_lea.vmem %s2, 4
    %s44 = sor.u32 255, 127
    %s45 = sand.u32 %s44, 85
    %s46 = sshrl.u32 %s45, 1
    %s47 = sor.u32 %s45, %s46
    %s48 = sand.u32 51, %s47
    %s49 = sshrl.u32 %s48, 2
    %s50 = sor.u32 %s48, %s49
    %s51 = sand.u32 15, %s50
    %v52 = vld [vmem:[%s42] sm:%s51]
    %v53 = vunpack.c.l.bf16 %v52
    %v54 = vunpack.c.h.bf16 %v52
    %v55 = vlaneseq
    %v56 = vand.u32 %v55, 127
    %vm58 = vcmp.lt.s32.totalorder %v56, 64
    %v59 = vsel %vm58, %v53, %v10
    %s60 = scalar_lea.vmem [#allocation9], 4
    %v61 = vpack.c.bf16 0.0, %v59
    %s63 = ssub.s32 16, 1
    %64 = vst [vmem:[%s60] sm:%s63] %v61
    %s65 = scalar_lea.vmem %s2, 8
    %s67 = sor.u32 255, 127
    %s68 = sand.u32 %s67, 85
    %s69 = sshrl.u32 %s68, 1
    %s70 = sor.u32 %s68, %s69
    %s71 = sand.u32 51, %s70
    %s72 = sshrl.u32 %s71, 2
    %s73 = sor.u32 %s71, %s72
    %s74 = sand.u32 15, %s73
    %v75 = vld [vmem:[%s65] sm:%s74]
    %v76 = vunpack.c.l.bf16 %v75
    %v77 = vunpack.c.h.bf16 %v75
    %v78 = vlaneseq
    %v79 = vand.u32 %v78, 127
    %vm81 = vcmp.lt.s32.totalorder %v79, 64
    %v82 = vsel %vm81, %v76, %v10
    %s83 = scalar_lea.vmem [#allocation9], 8
    %v84 = vpack.c.bf16 0.0, %v82
    %s86 = ssub.s32 16, 1
    %87 = vst [vmem:[%s83] sm:%s86] %v84
    %s88 = scalar_lea.vmem %s2, 12
    %s90 = sor.u32 255, 127
    %s91 = sand.u32 %s90, 85
    %s92 = sshrl.u32 %s91, 1
    %s93 = sor.u32 %s91, %s92
    %s94 = sand.u32 51, %s93
    %s95 = sshrl.u32 %s94, 2
    %s96 = sor.u32 %s94, %s95
    %s97 = sand.u32 15, %s96
    %v98 = vld [vmem:[%s88] sm:%s97]
    %v99 = vunpack.c.l.bf16 %v98
    %v100 = vunpack.c.h.bf16 %v98
    %v101 = vlaneseq
    %v102 = vand.u32 %v101, 127
    %vm104 = vcmp.lt.s32.totalorder %v102, 64
    %v105 = vsel %vm104, %v99, %v10
    %s106 = scalar_lea.vmem [#allocation9], 12
    %v107 = vpack.c.bf16 0.0, %v105
    %s109 = ssub.s32 16, 1
    %110 = vst [vmem:[%s106] sm:%s109] %v107
    %v112 = vld [vmem:[#allocation9] sm:$0xf]
    %v113 = vld [vmem:[#allocation9 + $0x4] sm:$0xf]
    %v114 = vld [vmem:[#allocation9 + $0x8] sm:$0xf]
    %v115 = vld [vmem:[#allocation9 + $0xc] sm:$0xf]
    %v116 = vld [vmem:[%s0] sm:$0xf]
    %v117 = vld [vmem:[%s0 + $0x4] sm:$0xf]
    %v118 = vld [vmem:[%s0 + $0x8] sm:$0xf]
    %v119 = vld [vmem:[%s0 + $0xc] sm:$0xf]
    %v120 = vld [vmem:[%s0 + $0x10] sm:$0xf]
    %v121 = vld [vmem:[%s0 + $0x14] sm:$0xf]
    %v122 = vld [vmem:[%s0 + $0x18] sm:$0xf]
    %v123 = vld [vmem:[%s0 + $0x1c] sm:$0xf]
    %v124 = vld [vmem:[%s0 + $0x20] sm:$0xf]
    %v125 = vld [vmem:[%s0 + $0x24] sm:$0xf]
    %v126 = vld [vmem:[%s0 + $0x28] sm:$0xf]
    %v127 = vld [vmem:[%s0 + $0x2c] sm:$0xf]
    %v128 = vld [vmem:[%s0 + $0x30] sm:$0xf]
    %v129 = vld [vmem:[%s0 + $0x34] sm:$0xf]
    %v130 = vld [vmem:[%s0 + $0x38] sm:$0xf]
    %v131 = vld [vmem:[%s0 + $0x3c] sm:$0xf]
    %v132 = vld [vmem:[%s1] sm:$0x1]
    %v134 = vlaneseq
    %v135 = vshrl.u32 %v134, 7
    %v136 = vsub.s32 0, %v135
    %v137 = vrot.slane %v132, %v136
    %v143 = vunpack.c.l.b16 %v112
    %v144 = vunpack.c.l.b16 %v113
    %v145 = vunpack.c.l.b16 %v114
    %v146 = vunpack.c.l.b16 %v115
    %v147 = vpack.c.b16 %v144, %v143
    %v148 = vpack.c.b16 %v146, %v145
    %v167 = vunpack.c.l.b16 %v116
    %v168 = vunpack.c.l.b16 %v117
    %v169 = vunpack.c.l.b16 %v118
    %v170 = vunpack.c.l.b16 %v119
    %v171 = vunpack.c.l.b16 %v120
    %v172 = vunpack.c.l.b16 %v121
    %v173 = vunpack.c.l.b16 %v122
    %v174 = vunpack.c.l.b16 %v123
    %v175 = vunpack.c.l.b16 %v124
    %v176 = vunpack.c.l.b16 %v125
    %v177 = vunpack.c.l.b16 %v126
    %v178 = vunpack.c.l.b16 %v127
    %v179 = vunpack.c.l.b16 %v128
    %v180 = vunpack.c.l.b16 %v129
    %v181 = vunpack.c.l.b16 %v130
    %v182 = vunpack.c.l.b16 %v131
    %v183 = vpack.c.b16 %v168, %v167
    %v184 = vpack.c.b16 %v170, %v169
    %v185 = vpack.c.b16 %v172, %v171
    %v186 = vpack.c.b16 %v174, %v173
    %v187 = vpack.c.b16 %v176, %v175
    %v188 = vpack.c.b16 %v178, %v177
    %v189 = vpack.c.b16 %v180, %v179
    %v190 = vpack.c.b16 %v182, %v181
    %199 = vmatprep.subr.bf16.mxu0 0
    %200 = vmatpush1.bf16.msra.mxu0 %v190
    %201 = vmatprep.subr.bf16.mxu0 0
    %202 = vmatpush1.bf16.msra.mxu0 %v189
    %203 = vmatprep.subr.bf16.mxu0 0
    %204 = vmatpush1.bf16.msra.mxu0 %v188
    %205 = vmatprep.subr.bf16.mxu0 0
    %206 = vmatpush1.bf16.msra.mxu0 %v187
    %207 = vmatprep.subr.bf16.mxu0 0
    %208 = vmatpush1.bf16.msra.mxu0 %v186
    %209 = vmatprep.subr.bf16.mxu0 0
    %210 = vmatpush1.bf16.msra.mxu0 %v185
    %211 = vmatprep.subr.bf16.mxu0 0
    %212 = vmatpush1.bf16.msra.mxu0 %v184
    %213 = vmatprep.subr.bf16.mxu0 0
    %214 = vmatpush1.bf16.msra.mxu0 %v183
    %215 = vmatprep.subr.bf16.mxu0 0
    %216 = vmatpush2.bf16.msra.mxu0 0
    %217 = vmatprep.subr.bf16.mxu0 0
    %218 = vmatpush2.bf16.msra.mxu0 0
    %219 = vmatprep.subr.bf16.mxu0 0
    %220 = vmatpush2.bf16.msra.mxu0 0
    %221 = vmatprep.subr.bf16.mxu0 0
    %222 = vmatpush2.bf16.msra.mxu0 0
    %223 = vmatprep.subr.bf16.mxu0 0
    %224 = vmatpush2.bf16.msra.mxu0 0
    %225 = vmatprep.subr.bf16.mxu0 0
    %226 = vmatpush2.bf16.msra.mxu0 0
    %227 = vmatprep.subr.bf16.mxu0 0
    %228 = vmatpush2.bf16.msra.mxu0 0
    %229 = vmatprep.subr.bf16.mxu0 0
    %230 = vmatpush2.bf16.msra.mxu0 0
    %231 = vmatprep.mubr.bf16.mxu0 0
    %232 = vmatmul.mubr.bf16.gmra.mxu0 %v147
    %v233 = vpop.f32.mrf.mxu0
    %v234 = vadd.f32 %v137, %v233
    %v235 = vpop.f32.mrf.mxu0
    %v236 = vpop.f32.mrf.mxu0
    %v237 = vadd.f32 %v137, %v236
    %v238 = vpop.f32.mrf.mxu0
    %239 = vmatprep.mubr.bf16.mxu0 0
    %240 = vmatmul.mubr.bf16.gmra.mxu0 %v148
    %v241 = vpop.f32.mrf.mxu0
    %v242 = vadd.f32 %v137, %v241
    %v243 = vpop.f32.mrf.mxu0
    %v244 = vpop.f32.mrf.mxu0
    %v245 = vadd.f32 %v137, %v244
    %v246 = vpop.f32.mrf.mxu0
    %247 = vdwg.mxu0
    %248 = vst [vmem:[#allocation7] sm:$0xff] %v234
    %249 = vst [vmem:[#allocation7 + $0x8] sm:$0xff] %v237
    %250 = vst [vmem:[#allocation7 + $0x10] sm:$0xff] %v242
    %251 = vst [vmem:[#allocation7 + $0x18] sm:$0xff] %v245
    // Predicated region
    $region14: #{patch_embed.2} parent=1 // pred_check
      _
    $region15: #{patch_embed.2} parent=1 // pred_check_branch
      %253 = sbr.rel (0) target = $region17
    $region16: #{patch_embed.2} parent=1 // pred_region
      %s255 = ssub.s32 512, 512
      %256 = vsyncadd [#allocation8], %s255
      %s257 = sshll.u32 [#allocation7], 4
      %s258 = int_to_ptr.vmem [resolvable:$true] %s257
      %263 = dma.vmem_to_hbm [thread:$0]  %s258, 512, %s4, [#allocation8], 128, 128, 8
    $region17: #{patch_embed.2} parent=1 // pred_fallthru
      _
    // Predicated region
    $region18: #{patch_embed.2} parent=1 // pred_check
      _
    $region19: #{patch_embed.2} parent=1 // pred_check_branch
      %265 = sbr.rel (0) target = $region21
    $region20: #{patch_embed.2} parent=1 // pred_region
      %266 = dma.done [#allocation8], 512
    $region21: #{patch_embed.2} parent=1 // pred_fallthru
      _
    %267 = vsyncpa [#allocation8], 1

</llo_original>
